<compile_context>
chip_gen: v7x
topology: tpu7x:2x2x1
jax: 0.10.0
libtpu: 0.0.40
codegen_flags: <defaults>
</compile_context>

<pallas_src>
import jax
import jax.numpy as jnp
from jax.experimental import pallas as pl
from jax.experimental.pallas import tpu as pltpu


_X_BUFFER_BYTES = 8 * 1024 * 1024  # per x-stream buffer; x2 double-buffered -> 16 MiB (+weight/out)


def _round_up(n, m):
    return ((n + m - 1) // m) * m


def _pick_row_tile(b_rows, f_cols):
    """Rows per tile (multiple of 128 unless a single full-extent tile) and tile count."""
    # VMEM footprint of one f32 row of the streamed block uses the lane-padded width.
    row_bytes = _round_up(f_cols, 128) * 4
    tb = max(128, (_X_BUFFER_BYTES // row_bytes) // 128 * 128)
    if b_rows > 128:
        # >= 2 grid steps (even-ish split) so both v7x TensorCores get work.
        tb = min(tb, _round_up(pl.cdiv(b_rows, 2), 128))
    if tb >= b_rows:
        return b_rows, 1  # single full-extent tile (block dim == array dim)
    return tb, pl.cdiv(b_rows, tb)


def shallow_ann_kernel(x_ref, w_ref, b_ref, o_ref):
    # x_ref: (TB, Fp) VMEM streamed tile; w_ref: (K, Fp) VMEM resident (block-diag packed weight);
    # b_ref: (1, 1) SMEM scalar; o_ref: (K, TB) VMEM lane-dense row block.
    # fc: y[j, r] = <w, x_row(r*K + j)> ; transposed MXU dot keeps the output lane-dense.
    y = jax.lax.dot_general(
        w_ref[...], x_ref[...],
        dimension_numbers=(((1,), (1,)), ((), ())),
        preferred_element_type=jnp.float32,
        precision=jax.lax.Precision.HIGHEST,
    )
    y = y + b_ref[0, 0]
    # TODO(synk): mcdropout.Dropout is stochastic MC-dropout; treated as identity (PyTorch
    # eval-mode Dropout). If MC sampling is required, add pltpu.prng_seed + prng_random_bits
    # masking with 1/(1-p) scaling.
    # Sigmoid (exp issues on the otherwise-idle EUP slot).
    o_ref[...] = 1.0 / (1.0 + jnp.exp(-y))
    # NOTE: nn.ReLU() is constructed in the module but never used in forward(), so it is omitted.


def shallow_ann_forward(x, weight, bias):
    """x: (B, F) f32, weight: (1, F) f32, bias: (1,) f32 -> (B, 1) f32."""
    B, F = x.shape
    x = x.astype(jnp.float32)
    weight = weight.reshape(1, F).astype(jnp.float32)

    # Free row-packing for small F: k logical rows per physical row -> full lane occupancy.
    k = 1
    if F < 128 and 128 % F == 0 and B % (128 // F) == 0:
        k = 128 // F
    b_rows, f_cols = B // k, F * k
    x_p = x.reshape(b_rows, f_cols)  # row-major reshape: free, no HBM copy
    # Block-diagonal packed weight rows: w_rows[j, j*F:(j+1)*F] = w (identity when k == 1).
    w_rows = jnp.kron(jnp.eye(k, dtype=jnp.float32), weight)

    tb, num_tiles = _pick_row_tile(b_rows, f_cols)
    b_smem = bias.reshape(1, 1).astype(jnp.float32)

    out = pl.pallas_call(
        shallow_ann_kernel,
        out_shape=jax.ShapeDtypeStruct((k, num_tiles * tb), jnp.float32),
        grid_spec=pltpu.PrefetchScalarGridSpec(
            num_scalar_prefetch=0,
            grid=(num_tiles,),
            in_specs=[
                pl.BlockSpec((tb, f_cols), lambda i: (i, 0)),        # streamed x row tiles
                pl.BlockSpec((k, f_cols), lambda i: (0, 0)),         # weight resident in VMEM
                pl.BlockSpec(memory_space=pltpu.MemorySpace.SMEM),   # bias scalar in SMEM
            ],
            out_specs=pl.BlockSpec((k, tb), lambda i: (0, i)),       # lane-dense row writes
        ),
        compiler_params=pltpu.CompilerParams(
            dimension_semantics=("parallel",),          # shard batch tiles across TCs (v7x)
            vmem_limit_bytes=32 * 1024 * 1024,          # covers v5e's 16 MiB scoped default
        ),
    )(x_p, w_rows, b_smem)

    # Unpack: out[j, r] is the result for batch row r*k + j; drop the ragged tail, restore order.
    return out[:, :b_rows].T.reshape(B, 1)


if __name__ == "__main__":
    key = jax.random.PRNGKey(0)
    kx, kw, kb, kx2 = jax.random.split(key, 4)

    n_features = 32
    # Deterministic parameter init (mimics nn.Linear's uniform(-1/sqrt(F), 1/sqrt(F)) bound).
    bound = 1.0 / (n_features ** 0.5)
    weight = jax.random.uniform(kw, (1, n_features), minval=-bound, maxval=bound, dtype=jnp.float32)
    bias = jax.random.uniform(kb, (1,), minval=-bound, maxval=bound, dtype=jnp.float32)

    def reference(xv):
        # Exact f32 elementwise reference (avoids TPU default bf16 matmul precision).
        return jax.nn.sigmoid(jnp.sum(xv * weight, axis=-1, keepdims=True) + bias)

    # Small batch (exercises the packed, single full-extent tile path).
    x_small = jax.random.normal(kx, (16, n_features), dtype=jnp.float32)
    out_small = jax.block_until_ready(shallow_ann_forward(x_small, weight, bias))
    assert out_small.shape == (16, 1)
    assert jnp.allclose(out_small, reference(x_small), atol=1e-4), "mismatch (small batch)"

    # Odd batch (exercises the unpacked, multi-tile path with a ragged last tile, no padding).
    x_odd = jax.random.normal(kx2, (1003, n_features), dtype=jnp.float32)
    out_odd = jax.block_until_ready(shallow_ann_forward(x_odd, weight, bias))
    assert out_odd.shape == (1003, 1)
    assert jnp.allclose(out_odd, reference(x_odd), atol=1e-4), "mismatch (ragged multi-tile batch)"

    print("KERNEL_OK")
</pallas_src>

<mosaic_0001>
module attributes {stable_mosaic.version = 11 : i64} {
  func.func @shallow_ann_kernel(%arg0: i32, %arg1: memref<4x128xf32, #tpu.memory_space<vmem>>, %arg2: memref<4x128xf32, #tpu.memory_space<vmem>>, %arg3: memref<1x1xf32, #tpu.memory_space<smem>>, %arg4: memref<4x4xf32, #tpu.memory_space<vmem>>) attributes {dimension_semantics = [#tpu.dimension_semantics<parallel>], iteration_bounds = array<i64: 1>, scalar_prefetch = 0 : i64, scratch_operands = 0 : i64, tpu.core_type = #tpu.core_type<tc>, window_params = [{transform_indices = @transform_0, window_bounds = array<i64: 4, 128>}, {pipeline_mode = #tpu.pipeline_mode<synchronous>, transform_indices = @transform_1, window_bounds = array<i64: 4, 128>}, {transform_indices = @transform_2, window_bounds = array<i64: 1, 1>}, {transform_indices = @transform_3, window_bounds = array<i64: 4, 4>}]} {
    %c0 = arith.constant 0 : index
    %c0_0 = arith.constant 0 : index
    %0 = vector.load %arg2[%c0, %c0_0] : memref<4x128xf32, #tpu.memory_space<vmem>>, vector<4x128xf32>
    %c0_1 = arith.constant 0 : index
    %c0_2 = arith.constant 0 : index
    %1 = vector.load %arg1[%c0_1, %c0_2] : memref<4x128xf32, #tpu.memory_space<vmem>>, vector<4x128xf32>
    %cst = arith.constant dense<0.000000e+00> : vector<4x4xf32>
    %2 = tpu.matmul %0, %1, %cst {dimension_numbers = #tpu.dot_dimension_numbers<[1], [1], [0], [0], [0, 0, 1, 0], [], []>, precision = #tpu.contract_precision<fp32>} : vector<4x128xf32>, vector<4x128xf32>, vector<4x4xf32> -> vector<4x4xf32>
    %c0_3 = arith.constant 0 : index
    %c0_4 = arith.constant 0 : index
    %3 = memref.load %arg3[%c0_3, %c0_4] : memref<1x1xf32, #tpu.memory_space<smem>>
    %4 = vector.broadcast %3 : f32 to vector<4x4xf32>
    %5 = arith.addf %2, %4 : vector<4x4xf32>
    %cst_5 = arith.constant 0.000000e+00 : f32
    %6 = vector.broadcast %cst_5 : f32 to vector<4x4xf32>
    %7 = arith.subf %6, %5 : vector<4x4xf32>
    %8 = math.exp %7 : vector<4x4xf32>
    %cst_6 = arith.constant 1.000000e+00 : f32
    %9 = vector.broadcast %cst_6 : f32 to vector<4x4xf32>
    %10 = arith.addf %9, %8 : vector<4x4xf32>
    %cst_7 = arith.constant 1.000000e+00 : f32
    %11 = vector.broadcast %cst_7 : f32 to vector<4x4xf32>
    %12 = arith.divf %11, %10 : vector<4x4xf32>
    %c0_8 = arith.constant 0 : index
    %c0_9 = arith.constant 0 : index
    %13 = vector.load %arg4[%c0_8, %c0_9] : memref<4x4xf32, #tpu.memory_space<vmem>>, vector<4x4xf32>
    tpu.vector_store %arg4[%c0_8, %c0_9], %12 {strides = array<i32>} : memref<4x4xf32, #tpu.memory_space<vmem>>, vector<4x4xf32>,
    return
  }
  func.func @transform_0(%arg0: i32) -> (i32, i32) {
    %c0_i32 = arith.constant 0 : i32
    %c0_i32_0 = arith.constant 0 : i32
    return %arg0, %c0_i32 : i32, i32
  }
  func.func @transform_1(%arg0: i32) -> (i32, i32) {
    %c0_i32 = arith.constant 0 : i32
    %c0_i32_0 = arith.constant 0 : i32
    %c0_i32_1 = arith.constant 0 : i32
    return %c0_i32, %c0_i32_0 : i32, i32
  }
  func.func @transform_2(%arg0: i32) -> (i32, i32) {
    %c0_i32 = arith.constant 0 : i32
    %c0_i32_0 = arith.constant 0 : i32
    %c0_i32_1 = arith.constant 0 : i32
    return %c0_i32, %c0_i32_0 : i32, i32
  }
  func.func @transform_3(%arg0: i32) -> (i32, i32) {
    %c0_i32 = arith.constant 0 : i32
    %c0_i32_0 = arith.constant 0 : i32
    return %c0_i32, %arg0 : i32, i32
  }
}

</mosaic_0001>

<llo_original>
// kernel: tpu_custom_call.1
$region0: #{tpu_custom_call.1}
  #allocation0 [shape = 'u32[]', space=smem, size = 0x4, offset = 0x4, fixed_abs, tag = 'smem constant byte address 0x4 - core index']
  #allocation1 [shape = 'u32[144,128]{1,0:T(1,128)}', space=vmem, size = 0x12000, scoped, tag = 'internal scratch']
  #allocation2 [shape = 'f32[1,1]{1,0:T(1,128)S(6)}', space=smem, size = 0x200, scoped, tag = 'scoped memory for tpu_custom_call.1']
  %s0 = inlined_call_operand.hbm [shape: f32[4,128], index: 0, kind: input, shape index: {}]
  %s1 = inlined_call_operand.vmem [shape: f32[4,128], index: 1, kind: input, shape index: {}]
  %s2 = inlined_call_operand.<no memory space> [shape: f32[1,1], index: 2, kind: input, shape index: {}]
  %s3 = inlined_call_operand.hbm [shape: f32[4,4], index: 3, kind: output, shape index: {}]
  %s4 = sld [smem:[#allocation0]]
  $region26: #{tpu_custom_call.1} parent=0
    _
  %s6 = ssub.s32 1, %s4
  %s7 = scalar_select 0, %s6, %s4
  %8 = sst [smem:[#allocation2]] %s2
  $region1: #{tpu_custom_call.1} parent=0
    #allocation3 [shape = 'u8[2048]{0}', space=vmem, size = 0x800, scoped, tag = 'input window, operand 0, single buffered']
    #allocation4 [shape = 's32[1]{0}', space=sflag, size = 0x4, scoped, tag = 'scoped memory for tpu_custom_call.1']
    #allocation5 [shape = 's32[1]{0}', space=sflag, size = 0x4, scoped, tag = 'scoped memory for tpu_custom_call.1']
    #allocation6 [shape = 'u8[2048]{0}', space=vmem, size = 0x800, scoped, tag = 'output window, operand 0, single buffered']
    %9 = vsyncpa [#allocation4], 0
    %10 = vsyncpa [#allocation5], 0
    // Predicated region
    $region2: #{tpu_custom_call.1} parent=1 // pred_check
      _
    $region3: #{tpu_custom_call.1} parent=1 // pred_check_branch
      %12 = sbr.rel (0) target = $region5
    $region4: #{tpu_custom_call.1} parent=1 // pred_region
      %s14 = ssub.s32 64, 64
      %15 = vsyncadd [#allocation4], %s14
      %s17 = sshll.u32 [#allocation3], 4
      %s18 = int_to_ptr.vmem [resolvable:$true] %s17
      %20 = dma.hbm_to_vmem [thread:$0]  %s0, 64, %s18, [#allocation4]
    $region5: #{tpu_custom_call.1} parent=1 // pred_fallthru
      _
    // Predicated region
    $region6: #{tpu_custom_call.1} parent=1 // pred_check
      _
    $region7: #{tpu_custom_call.1} parent=1 // pred_check_branch
      %22 = sbr.rel (0) target = $region9
    $region8: #{tpu_custom_call.1} parent=1 // pred_region
      _
    $region9: #{tpu_custom_call.1} parent=1 // pred_fallthru
      _
    // Predicated region
    $region10: #{tpu_custom_call.1} parent=1 // pred_check
      _
    $region11: #{tpu_custom_call.1} parent=1 // pred_check_branch
      %24 = sbr.rel (0) target = $region13
    $region12: #{tpu_custom_call.1} parent=1 // pred_region
      _
    $region13: #{tpu_custom_call.1} parent=1 // pred_fallthru
      _
    // Predicated region
    $region14: #{tpu_custom_call.1} parent=1 // pred_check
      _
    $region15: #{tpu_custom_call.1} parent=1 // pred_check_branch
      %26 = sbr.rel (0) target = $region17
    $region16: #{tpu_custom_call.1} parent=1 // pred_region
      %27 = dma.done [#allocation4], 64
    $region17: #{tpu_custom_call.1} parent=1 // pred_fallthru
      _
    %v28 = vld [vmem:[%s1] sm:$0xf]
    %v29 = vld [vmem:[#allocation3] sm:$0xf]
    %s30 = sld [smem:[#allocation2]]
    %v31 = vstv %s30
    %32 = vmatprep.subr.mxu0 0.0
    %v33 = vand.u32 %v29, 4294901760
    %34 = vmatpush1.xpose.msra.mxu0 %v33
    %35 = vmatprep.subr.mxu0 0.0
    %36 = vmatpush1.xpose.msra.mxu0 0.0
    %37 = vmatprep.subr.mxu0 0.0
    %38 = vmatpush1.xpose.msra.mxu0 0.0
    %39 = vmatprep.subr.mxu0 0.0
    %40 = vmatpush1.xpose.msra.mxu0 0.0
    %41 = vmatprep.subr.mxu0 0.0
    %42 = vmatpush1.xpose.msra.mxu0 0.0
    %43 = vmatprep.subr.mxu0 0.0
    %44 = vmatpush1.xpose.msra.mxu0 0.0
    %45 = vmatprep.subr.mxu0 0.0
    %46 = vmatpush1.xpose.msra.mxu0 0.0
    %47 = vmatprep.subr.mxu0 0.0
    %48 = vmatpush1.xpose.msra.mxu0 0.0
    %49 = vmatprep.subr.mxu0 0.0
    %50 = vmatpush1.xpose.msra.mxu0 0.0
    %51 = vmatprep.subr.mxu0 0.0
    %52 = vmatpush1.xpose.msra.mxu0 0.0
    %53 = vmatprep.subr.mxu0 0.0
    %54 = vmatpush1.xpose.msra.mxu0 0.0
    %55 = vmatprep.subr.mxu0 0.0
    %56 = vmatpush1.xpose.msra.mxu0 0.0
    %57 = vmatprep.subr.mxu0 0.0
    %58 = vmatpush1.xpose.msra.mxu0 0.0
    %59 = vmatprep.subr.mxu0 0.0
    %60 = vmatpush1.xpose.msra.mxu0 0.0
    %61 = vmatprep.subr.mxu0 0.0
    %62 = vmatpush1.xpose.msra.mxu0 0.0
    %63 = vmatprep.subr.mxu0 0.0
    %64 = vmatpush1.xpose.msra.mxu0 0.0
    %65 = vmatprep.subr.mxu0 0.0
    %66 = vmatpush1.xpose.msra.mxu0 0.0
    %67 = vmatprep.subr.mxu0 0.0
    %68 = vmatpush1.xpose.msra.mxu0 0.0
    %69 = vmatprep.subr.mxu0 0.0
    %70 = vmatpush1.xpose.msra.mxu0 0.0
    %71 = vmatprep.subr.mxu0 0.0
    %72 = vmatpush1.xpose.msra.mxu0 0.0
    %73 = vmatprep.subr.mxu0 0.0
    %74 = vmatpush1.xpose.msra.mxu0 0.0
    %75 = vmatprep.subr.mxu0 0.0
    %76 = vmatpush1.xpose.msra.mxu0 0.0
    %77 = vmatprep.subr.mxu0 0.0
    %78 = vmatpush1.xpose.msra.mxu0 0.0
    %79 = vmatprep.subr.mxu0 0.0
    %80 = vmatpush1.xpose.msra.mxu0 0.0
    %81 = vmatprep.subr.mxu0 0.0
    %82 = vmatpush1.xpose.msra.mxu0 0.0
    %83 = vmatprep.subr.mxu0 0.0
    %84 = vmatpush1.xpose.msra.mxu0 0.0
    %85 = vmatprep.subr.mxu0 0.0
    %86 = vmatpush1.xpose.msra.mxu0 0.0
    %87 = vmatprep.subr.mxu0 0.0
    %88 = vmatpush1.xpose.msra.mxu0 0.0
    %89 = vmatprep.subr.mxu0 0.0
    %90 = vmatpush1.xpose.msra.mxu0 0.0
    %91 = vmatprep.subr.mxu0 0.0
    %92 = vmatpush1.xpose.msra.mxu0 0.0
    %93 = vmatprep.subr.mxu0 0.0
    %94 = vmatpush1.xpose.msra.mxu0 0.0
    %95 = vmatprep.subr.mxu0 0.0
    %96 = vmatpush1.xpose.msra.mxu0 0.0
    %97 = vmatprep.mubr.f32.mxu0 0.0
    %v98 = vand.u32 %v28, 4294901760
    %v99 = vsub.f32 %v28, %v98
    %v100 = vand.u32 %v99, 4294901760
    %v101 = vsub.f32 %v99, %v100
    %v102 = vand.u32 %v101, 4294901760
    %103 = vmatmul.mubr.f32.gmra.mrb[0].mxu0 %v102
    %v104 = vpop.f32.mrb[0].mxu0
    %v105 = vadd.f32 %v31, %v104
    %v106 = vpop.f32.mrb[0].mxu0
    %107 = vdwg.mxu0
    %108 = vmatprep.subr.mxu0 0.0
    %v109 = vand.u32 %v29, 4294901760
    %v110 = vsub.f32 %v29, %v109
    %v111 = vand.u32 %v110, 4294901760
    %v112 = vsub.f32 %v110, %v111
    %v113 = vand.u32 %v112, 4294901760
    %114 = vmatpush1.xpose.msra.mxu0 %v113
    %115 = vmatprep.subr.mxu0 0.0
    %116 = vmatpush1.xpose.msra.mxu0 0.0
    %117 = vmatprep.subr.mxu0 0.0
    %118 = vmatpush1.xpose.msra.mxu0 0.0
    %119 = vmatprep.subr.mxu0 0.0
    %120 = vmatpush1.xpose.msra.mxu0 0.0
    %121 = vmatprep.subr.mxu0 0.0
    %122 = vmatpush1.xpose.msra.mxu0 0.0
    %123 = vmatprep.subr.mxu0 0.0
    %124 = vmatpush1.xpose.msra.mxu0 0.0
    %125 = vmatprep.subr.mxu0 0.0
    %126 = vmatpush1.xpose.msra.mxu0 0.0
    %127 = vmatprep.subr.mxu0 0.0
    %128 = vmatpush1.xpose.msra.mxu0 0.0
    %129 = vmatprep.subr.mxu0 0.0
    %130 = vmatpush1.xpose.msra.mxu0 0.0
    %131 = vmatprep.subr.mxu0 0.0
    %132 = vmatpush1.xpose.msra.mxu0 0.0
    %133 = vmatprep.subr.mxu0 0.0
    %134 = vmatpush1.xpose.msra.mxu0 0.0
    %135 = vmatprep.subr.mxu0 0.0
    %136 = vmatpush1.xpose.msra.mxu0 0.0
    %137 = vmatprep.subr.mxu0 0.0
    %138 = vmatpush1.xpose.msra.mxu0 0.0
    %139 = vmatprep.subr.mxu0 0.0
    %140 = vmatpush1.xpose.msra.mxu0 0.0
    %141 = vmatprep.subr.mxu0 0.0
    %142 = vmatpush1.xpose.msra.mxu0 0.0
    %143 = vmatprep.subr.mxu0 0.0
    %144 = vmatpush1.xpose.msra.mxu0 0.0
    %145 = vmatprep.subr.mxu0 0.0
    %146 = vmatpush1.xpose.msra.mxu0 0.0
    %147 = vmatprep.subr.mxu0 0.0
    %148 = vmatpush1.xpose.msra.mxu0 0.0
    %149 = vmatprep.subr.mxu0 0.0
    %150 = vmatpush1.xpose.msra.mxu0 0.0
    %151 = vmatprep.subr.mxu0 0.0
    %152 = vmatpush1.xpose.msra.mxu0 0.0
    %153 = vmatprep.subr.mxu0 0.0
    %154 = vmatpush1.xpose.msra.mxu0 0.0
    %155 = vmatprep.subr.mxu0 0.0
    %156 = vmatpush1.xpose.msra.mxu0 0.0
    %157 = vmatprep.subr.mxu0 0.0
    %158 = vmatpush1.xpose.msra.mxu0 0.0
    %159 = vmatprep.subr.mxu0 0.0
    %160 = vmatpush1.xpose.msra.mxu0 0.0
    %161 = vmatprep.subr.mxu0 0.0
    %162 = vmatpush1.xpose.msra.mxu0 0.0
    %163 = vmatprep.subr.mxu0 0.0
    %164 = vmatpush1.xpose.msra.mxu0 0.0
    %165 = vmatprep.subr.mxu0 0.0
    %166 = vmatpush1.xpose.msra.mxu0 0.0
    %167 = vmatprep.subr.mxu0 0.0
    %168 = vmatpush1.xpose.msra.mxu0 0.0
    %169 = vmatprep.subr.mxu0 0.0
    %170 = vmatpush1.xpose.msra.mxu0 0.0
    %171 = vmatprep.subr.mxu0 0.0
    %172 = vmatpush1.xpose.msra.mxu0 0.0
    %173 = vmatprep.subr.mxu0 0.0
    %174 = vmatpush1.xpose.msra.mxu0 0.0
    %175 = vmatprep.subr.mxu0 0.0
    %176 = vmatpush1.xpose.msra.mxu0 0.0
    %177 = vmatprep.mubr.f32.mxu0 0.0
    %v178 = vand.u32 %v28, 4294901760
    %179 = vmatmul.mubr.f32.gmra.mrb[0].mxu0 %v178
    %v180 = vpop.f32.mrb[0].mxu0
    %v181 = vadd.f32 %v105, %v180
    %v182 = vpop.f32.mrb[0].mxu0
    %183 = vdwg.mxu0
    %184 = vmatprep.subr.mxu0 0.0
    %v185 = vand.u32 %v29, 4294901760
    %v186 = vsub.f32 %v29, %v185
    %187 = vmatpush1.xpose.msra.mxu0 %v186
    %188 = vmatprep.subr.mxu0 0.0
    %189 = vmatpush1.xpose.msra.mxu0 0.0
    %190 = vmatprep.subr.mxu0 0.0
    %191 = vmatpush1.xpose.msra.mxu0 0.0
    %192 = vmatprep.subr.mxu0 0.0
    %193 = vmatpush1.xpose.msra.mxu0 0.0
    %194 = vmatprep.subr.mxu0 0.0
    %195 = vmatpush1.xpose.msra.mxu0 0.0
    %196 = vmatprep.subr.mxu0 0.0
    %197 = vmatpush1.xpose.msra.mxu0 0.0
    %198 = vmatprep.subr.mxu0 0.0
    %199 = vmatpush1.xpose.msra.mxu0 0.0
    %200 = vmatprep.subr.mxu0 0.0
    %201 = vmatpush1.xpose.msra.mxu0 0.0
    %202 = vmatprep.subr.mxu0 0.0
    %203 = vmatpush1.xpose.msra.mxu0 0.0
    %204 = vmatprep.subr.mxu0 0.0
    %205 = vmatpush1.xpose.msra.mxu0 0.0
    %206 = vmatprep.subr.mxu0 0.0
    %207 = vmatpush1.xpose.msra.mxu0 0.0
    %208 = vmatprep.subr.mxu0 0.0
    %209 = vmatpush1.xpose.msra.mxu0 0.0
    %210 = vmatprep.subr.mxu0 0.0
    %211 = vmatpush1.xpose.msra.mxu0 0.0
    %212 = vmatprep.subr.mxu0 0.0
    %213 = vmatpush1.xpose.msra.mxu0 0.0
    %214 = vmatprep.subr.mxu0 0.0
    %215 = vmatpush1.xpose.msra.mxu0 0.0
    %216 = vmatprep.subr.mxu0 0.0
    %217 = vmatpush1.xpose.msra.mxu0 0.0
    %218 = vmatprep.subr.mxu0 0.0
    %219 = vmatpush1.xpose.msra.mxu0 0.0
    %220 = vmatprep.subr.mxu0 0.0
    %221 = vmatpush1.xpose.msra.mxu0 0.0
    %222 = vmatprep.subr.mxu0 0.0
    %223 = vmatpush1.xpose.msra.mxu0 0.0
    %224 = vmatprep.subr.mxu0 0.0
    %225 = vmatpush1.xpose.msra.mxu0 0.0
    %226 = vmatprep.subr.mxu0 0.0
    %227 = vmatpush1.xpose.msra.mxu0 0.0
    %228 = vmatprep.subr.mxu0 0.0
    %229 = vmatpush1.xpose.msra.mxu0 0.0
    %230 = vmatprep.subr.mxu0 0.0
    %231 = vmatpush1.xpose.msra.mxu0 0.0
    %232 = vmatprep.subr.mxu0 0.0
    %233 = vmatpush1.xpose.msra.mxu0 0.0
    %234 = vmatprep.subr.mxu0 0.0
    %235 = vmatpush1.xpose.msra.mxu0 0.0
    %236 = vmatprep.subr.mxu0 0.0
    %237 = vmatpush1.xpose.msra.mxu0 0.0
    %238 = vmatprep.subr.mxu0 0.0
    %239 = vmatpush1.xpose.msra.mxu0 0.0
    %240 = vmatprep.subr.mxu0 0.0
    %241 = vmatpush1.xpose.msra.mxu0 0.0
    %242 = vmatprep.subr.mxu0 0.0
    %243 = vmatpush1.xpose.msra.mxu0 0.0
    %244 = vmatprep.subr.mxu0 0.0
    %245 = vmatpush1.xpose.msra.mxu0 0.0
    %246 = vmatprep.subr.mxu0 0.0
    %247 = vmatpush1.xpose.msra.mxu0 0.0
    %248 = vmatprep.subr.mxu0 0.0
    %249 = vmatpush1.xpose.msra.mxu0 0.0
    %250 = vmatprep.mubr.f32.mxu0 0.0
    %v251 = vand.u32 %v28, 4294901760
    %v252 = vsub.f32 %v28, %v251
    %253 = vmatmul.mubr.f32.gmra.mrb[0].mxu0 %v252
    %v254 = vpop.f32.mrb[0].mxu0
    %v255 = vadd.f32 %v181, %v254
    %v256 = vpop.f32.mrb[0].mxu0
    %257 = vdwg.mxu0
    %258 = vmatprep.subr.mxu0 0.0
    %v259 = vand.u32 %v29, 4294901760
    %260 = vmatpush1.xpose.msra.mxu0 %v259
    %261 = vmatprep.subr.mxu0 0.0
    %262 = vmatpush1.xpose.msra.mxu0 0.0
    %263 = vmatprep.subr.mxu0 0.0
    %264 = vmatpush1.xpose.msra.mxu0 0.0
    %265 = vmatprep.subr.mxu0 0.0
    %266 = vmatpush1.xpose.msra.mxu0 0.0
    %267 = vmatprep.subr.mxu0 0.0
    %268 = vmatpush1.xpose.msra.mxu0 0.0
    %269 = vmatprep.subr.mxu0 0.0
    %270 = vmatpush1.xpose.msra.mxu0 0.0
    %271 = vmatprep.subr.mxu0 0.0
    %272 = vmatpush1.xpose.msra.mxu0 0.0
    %273 = vmatprep.subr.mxu0 0.0
    %274 = vmatpush1.xpose.msra.mxu0 0.0
    %275 = vmatprep.subr.mxu0 0.0
    %276 = vmatpush1.xpose.msra.mxu0 0.0
    %277 = vmatprep.subr.mxu0 0.0
    %278 = vmatpush1.xpose.msra.mxu0 0.0
    %279 = vmatprep.subr.mxu0 0.0
    %280 = vmatpush1.xpose.msra.mxu0 0.0
    %281 = vmatprep.subr.mxu0 0.0
    %282 = vmatpush1.xpose.msra.mxu0 0.0
    %283 = vmatprep.subr.mxu0 0.0
    %284 = vmatpush1.xpose.msra.mxu0 0.0
    %285 = vmatprep.subr.mxu0 0.0
    %286 = vmatpush1.xpose.msra.mxu0 0.0
    %287 = vmatprep.subr.mxu0 0.0
    %288 = vmatpush1.xpose.msra.mxu0 0.0
    %289 = vmatprep.subr.mxu0 0.0
    %290 = vmatpush1.xpose.msra.mxu0 0.0
    %291 = vmatprep.subr.mxu0 0.0
    %292 = vmatpush1.xpose.msra.mxu0 0.0
    %293 = vmatprep.subr.mxu0 0.0
    %294 = vmatpush1.xpose.msra.mxu0 0.0
    %295 = vmatprep.subr.mxu0 0.0
    %296 = vmatpush1.xpose.msra.mxu0 0.0
    %297 = vmatprep.subr.mxu0 0.0
    %298 = vmatpush1.xpose.msra.mxu0 0.0
    %299 = vmatprep.subr.mxu0 0.0
    %300 = vmatpush1.xpose.msra.mxu0 0.0
    %301 = vmatprep.subr.mxu0 0.0
    %302 = vmatpush1.xpose.msra.mxu0 0.0
    %303 = vmatprep.subr.mxu0 0.0
    %304 = vmatpush1.xpose.msra.mxu0 0.0
    %305 = vmatprep.subr.mxu0 0.0
    %306 = vmatpush1.xpose.msra.mxu0 0.0
    %307 = vmatprep.subr.mxu0 0.0
    %308 = vmatpush1.xpose.msra.mxu0 0.0
    %309 = vmatprep.subr.mxu0 0.0
    %310 = vmatpush1.xpose.msra.mxu0 0.0
    %311 = vmatprep.subr.mxu0 0.0
    %312 = vmatpush1.xpose.msra.mxu0 0.0
    %313 = vmatprep.subr.mxu0 0.0
    %314 = vmatpush1.xpose.msra.mxu0 0.0
    %315 = vmatprep.subr.mxu0 0.0
    %316 = vmatpush1.xpose.msra.mxu0 0.0
    %317 = vmatprep.subr.mxu0 0.0
    %318 = vmatpush1.xpose.msra.mxu0 0.0
    %319 = vmatprep.subr.mxu0 0.0
    %320 = vmatpush1.xpose.msra.mxu0 0.0
    %321 = vmatprep.subr.mxu0 0.0
    %322 = vmatpush1.xpose.msra.mxu0 0.0
    %323 = vmatprep.mubr.f32.mxu0 0.0
    %v324 = vand.u32 %v28, 4294901760
    %v325 = vsub.f32 %v28, %v324
    %v326 = vand.u32 %v325, 4294901760
    %327 = vmatmul.mubr.f32.gmra.mrb[0].mxu0 %v326
    %v328 = vpop.f32.mrb[0].mxu0
    %v329 = vadd.f32 %v255, %v328
    %v330 = vpop.f32.mrb[0].mxu0
    %331 = vdwg.mxu0
    %332 = vmatprep.subr.mxu0 0.0
    %v333 = vand.u32 %v29, 4294901760
    %v334 = vsub.f32 %v29, %v333
    %v335 = vand.u32 %v334, 4294901760
    %336 = vmatpush1.xpose.msra.mxu0 %v335
    %337 = vmatprep.subr.mxu0 0.0
    %338 = vmatpush1.xpose.msra.mxu0 0.0
    %339 = vmatprep.subr.mxu0 0.0
    %340 = vmatpush1.xpose.msra.mxu0 0.0
    %341 = vmatprep.subr.mxu0 0.0
    %342 = vmatpush1.xpose.msra.mxu0 0.0
    %343 = vmatprep.subr.mxu0 0.0
    %344 = vmatpush1.xpose.msra.mxu0 0.0
    %345 = vmatprep.subr.mxu0 0.0
    %346 = vmatpush1.xpose.msra.mxu0 0.0
    %347 = vmatprep.subr.mxu0 0.0
    %348 = vmatpush1.xpose.msra.mxu0 0.0
    %349 = vmatprep.subr.mxu0 0.0
    %350 = vmatpush1.xpose.msra.mxu0 0.0
    %351 = vmatprep.subr.mxu0 0.0
    %352 = vmatpush1.xpose.msra.mxu0 0.0
    %353 = vmatprep.subr.mxu0 0.0
    %354 = vmatpush1.xpose.msra.mxu0 0.0
    %355 = vmatprep.subr.mxu0 0.0
    %356 = vmatpush1.xpose.msra.mxu0 0.0
    %357 = vmatprep.subr.mxu0 0.0
    %358 = vmatpush1.xpose.msra.mxu0 0.0
    %359 = vmatprep.subr.mxu0 0.0
    %360 = vmatpush1.xpose.msra.mxu0 0.0
    %361 = vmatprep.subr.mxu0 0.0
    %362 = vmatpush1.xpose.msra.mxu0 0.0
    %363 = vmatprep.subr.mxu0 0.0
    %364 = vmatpush1.xpose.msra.mxu0 0.0
    %365 = vmatprep.subr.mxu0 0.0
    %366 = vmatpush1.xpose.msra.mxu0 0.0
    %367 = vmatprep.subr.mxu0 0.0
    %368 = vmatpush1.xpose.msra.mxu0 0.0
    %369 = vmatprep.subr.mxu0 0.0
    %370 = vmatpush1.xpose.msra.mxu0 0.0
    %371 = vmatprep.subr.mxu0 0.0
    %372 = vmatpush1.xpose.msra.mxu0 0.0
    %373 = vmatprep.subr.mxu0 0.0
    %374 = vmatpush1.xpose.msra.mxu0 0.0
    %375 = vmatprep.subr.mxu0 0.0
    %376 = vmatpush1.xpose.msra.mxu0 0.0
    %377 = vmatprep.subr.mxu0 0.0
    %378 = vmatpush1.xpose.msra.mxu0 0.0
    %379 = vmatprep.subr.mxu0 0.0
    %380 = vmatpush1.xpose.msra.mxu0 0.0
    %381 = vmatprep.subr.mxu0 0.0
    %382 = vmatpush1.xpose.msra.mxu0 0.0
    %383 = vmatprep.subr.mxu0 0.0
    %384 = vmatpush1.xpose.msra.mxu0 0.0
    %385 = vmatprep.subr.mxu0 0.0
    %386 = vmatpush1.xpose.msra.mxu0 0.0
    %387 = vmatprep.subr.mxu0 0.0
    %388 = vmatpush1.xpose.msra.mxu0 0.0
    %389 = vmatprep.subr.mxu0 0.0
    %390 = vmatpush1.xpose.msra.mxu0 0.0
    %391 = vmatprep.subr.mxu0 0.0
    %392 = vmatpush1.xpose.msra.mxu0 0.0
    %393 = vmatprep.subr.mxu0 0.0
    %394 = vmatpush1.xpose.msra.mxu0 0.0
    %395 = vmatprep.subr.mxu0 0.0
    %396 = vmatpush1.xpose.msra.mxu0 0.0
    %397 = vmatprep.subr.mxu0 0.0
    %398 = vmatpush1.xpose.msra.mxu0 0.0
    %399 = vmatprep.mubr.f32.mxu0 0.0
    %v400 = vand.u32 %v28, 4294901760
    %401 = vmatmul.mubr.f32.gmra.mrb[0].mxu0 %v400
    %v402 = vpop.f32.mrb[0].mxu0
    %v403 = vadd.f32 %v329, %v402
    %v404 = vpop.f32.mrb[0].mxu0
    %405 = vdwg.mxu0
    %406 = vmatprep.subr.mxu0 0.0
    %v407 = vand.u32 %v29, 4294901760
    %408 = vmatpush1.xpose.msra.mxu0 %v407
    %409 = vmatprep.subr.mxu0 0.0
    %410 = vmatpush1.xpose.msra.mxu0 0.0
    %411 = vmatprep.subr.mxu0 0.0
    %412 = vmatpush1.xpose.msra.mxu0 0.0
    %413 = vmatprep.subr.mxu0 0.0
    %414 = vmatpush1.xpose.msra.mxu0 0.0
    %415 = vmatprep.subr.mxu0 0.0
    %416 = vmatpush1.xpose.msra.mxu0 0.0
    %417 = vmatprep.subr.mxu0 0.0
    %418 = vmatpush1.xpose.msra.mxu0 0.0
    %419 = vmatprep.subr.mxu0 0.0
    %420 = vmatpush1.xpose.msra.mxu0 0.0
    %421 = vmatprep.subr.mxu0 0.0
    %422 = vmatpush1.xpose.msra.mxu0 0.0
    %423 = vmatprep.subr.mxu0 0.0
    %424 = vmatpush1.xpose.msra.mxu0 0.0
    %425 = vmatprep.subr.mxu0 0.0
    %426 = vmatpush1.xpose.msra.mxu0 0.0
    %427 = vmatprep.subr.mxu0 0.0
    %428 = vmatpush1.xpose.msra.mxu0 0.0
    %429 = vmatprep.subr.mxu0 0.0
    %430 = vmatpush1.xpose.msra.mxu0 0.0
    %431 = vmatprep.subr.mxu0 0.0
    %432 = vmatpush1.xpose.msra.mxu0 0.0
    %433 = vmatprep.subr.mxu0 0.0
    %434 = vmatpush1.xpose.msra.mxu0 0.0
    %435 = vmatprep.subr.mxu0 0.0
    %436 = vmatpush1.xpose.msra.mxu0 0.0
    %437 = vmatprep.subr.mxu0 0.0
    %438 = vmatpush1.xpose.msra.mxu0 0.0
    %439 = vmatprep.subr.mxu0 0.0
    %440 = vmatpush1.xpose.msra.mxu0 0.0
    %441 = vmatprep.subr.mxu0 0.0
    %442 = vmatpush1.xpose.msra.mxu0 0.0
    %443 = vmatprep.subr.mxu0 0.0
    %444 = vmatpush1.xpose.msra.mxu0 0.0
    %445 = vmatprep.subr.mxu0 0.0
    %446 = vmatpush1.xpose.msra.mxu0 0.0
    %447 = vmatprep.subr.mxu0 0.0
    %448 = vmatpush1.xpose.msra.mxu0 0.0
    %449 = vmatprep.subr.mxu0 0.0
    %450 = vmatpush1.xpose.msra.mxu0 0.0
    %451 = vmatprep.subr.mxu0 0.0
    %452 = vmatpush1.xpose.msra.mxu0 0.0
    %453 = vmatprep.subr.mxu0 0.0
    %454 = vmatpush1.xpose.msra.mxu0 0.0
    %455 = vmatprep.subr.mxu0 0.0
    %456 = vmatpush1.xpose.msra.mxu0 0.0
    %457 = vmatprep.subr.mxu0 0.0
    %458 = vmatpush1.xpose.msra.mxu0 0.0
    %459 = vmatprep.subr.mxu0 0.0
    %460 = vmatpush1.xpose.msra.mxu0 0.0
    %461 = vmatprep.subr.mxu0 0.0
    %462 = vmatpush1.xpose.msra.mxu0 0.0
    %463 = vmatprep.subr.mxu0 0.0
    %464 = vmatpush1.xpose.msra.mxu0 0.0
    %465 = vmatprep.subr.mxu0 0.0
    %466 = vmatpush1.xpose.msra.mxu0 0.0
    %467 = vmatprep.subr.mxu0 0.0
    %468 = vmatpush1.xpose.msra.mxu0 0.0
    %469 = vmatprep.subr.mxu0 0.0
    %470 = vmatpush1.xpose.msra.mxu0 0.0
    %471 = vmatprep.mubr.f32.mxu0 0.0
    %v472 = vand.u32 %v28, 4294901760
    %473 = vmatmul.mubr.f32.gmra.mrb[0].mxu0 %v472
    %v474 = vpop.f32.mrb[0].mxu0
    %v475 = vadd.f32 %v403, %v474
    %v476 = vpop.f32.mrb[0].mxu0
    %477 = vdwg.mxu0
    %v478 = vsub.f32 0.0, %v475
    %v479 = vmul.f32 %v478, 1.442695
    %v480 = vpow.pop %v479
    %v481 = vadd.f32 %v480, 1.0
    %v482 = vrcp.pop %v481
    %v483 = vmul.f32 1.0, %v482
    %vm484 = vcmask 27648
    %485 = vst.msk [vmem:[#allocation6] sm:$0xf] %vm484, %v483
    // Predicated region
    $region18: #{tpu_custom_call.1} parent=1 // pred_check
      _
    $region19: #{tpu_custom_call.1} parent=1 // pred_check_branch
      %487 = sbr.rel (0) target = $region21
    $region20: #{tpu_custom_call.1} parent=1 // pred_region
      %s489 = ssub.s32 64, 64
      %490 = vsyncadd [#allocation5], %s489
      %s492 = sshll.u32 [#allocation6], 4
      %s493 = int_to_ptr.vmem [resolvable:$true] %s492
      %495 = dma.vmem_to_hbm [thread:$0]  %s493, 64, %s3, [#allocation5]
    $region21: #{tpu_custom_call.1} parent=1 // pred_fallthru
      _
    // Predicated region
    $region22: #{tpu_custom_call.1} parent=1 // pred_check
      _
    $region23: #{tpu_custom_call.1} parent=1 // pred_check_branch
      %497 = sbr.rel (0) target = $region25
    $region24: #{tpu_custom_call.1} parent=1 // pred_region
      %498 = dma.done [#allocation5], 64
    $region25: #{tpu_custom_call.1} parent=1 // pred_fallthru
      _
    %499 = vsyncpa [#allocation4], 1
    %500 = vsyncpa [#allocation5], 1

</llo_original>
